<compile_context>
chip_gen: v6e
topology: v6e:2x2x1
jax: 0.10.0
libtpu: 0.0.40
codegen_flags: <defaults>
</compile_context>

<pallas_src>
import jax
import jax.numpy as jnp
from jax.experimental import pallas as pl
from jax.experimental.pallas import tpu as pltpu  # noqa: F401  (TPU backend)

INPUT_SIZE = 9
HIDDEN_SIZE = 100
OUTPUT_SIZE = 9
LANE = 128  # padded feature width (one f32 vreg lane row)


def _policy_kernel(x_ref, w_ref, b_ref, o_ref):
    x = x_ref[...]                                                  # (B, 128) f32

    # fc1 + relu
    h = jnp.dot(x, w_ref[0], preferred_element_type=jnp.float32) + b_ref[0]
    h = jnp.maximum(h, 0.0)

    # fc2 + relu
    h = jnp.dot(h, w_ref[1], preferred_element_type=jnp.float32) + b_ref[1]
    h = jnp.maximum(h, 0.0)

    # fc3 + relu
    h = jnp.dot(h, w_ref[2], preferred_element_type=jnp.float32) + b_ref[2]
    h = jnp.maximum(h, 0.0)

    # fc4
    logits = jnp.dot(h, w_ref[3], preferred_element_type=jnp.float32) + b_ref[3]

    # softmax over dim=0 (matches F.softmax(x, dim=0) in the reference module)
    m = jnp.max(logits, axis=0, keepdims=True)
    e = jnp.exp(logits - m)
    denom = jnp.sum(e, axis=0, keepdims=True)
    o_ref[...] = e * pl.reciprocal(denom, approx=True)


def policy_forward(x, packed_params):
    """x: (B, INPUT_SIZE) float32. Returns (B, OUTPUT_SIZE) float32."""
    w_stack, b_stack = packed_params
    B = x.shape[0]

    # Lane-pad the input once at the wrapper boundary (zero columns).
    x_pad = jnp.pad(x, ((0, 0), (0, LANE - x.shape[1])))

    out_pad = pl.pallas_call(
        _policy_kernel,
        out_shape=jax.ShapeDtypeStruct((B, LANE), jnp.float32),
        in_specs=[
            pl.BlockSpec((B, LANE), lambda: (0, 0)),
            pl.BlockSpec((4, LANE, LANE), lambda: (0, 0, 0)),
            pl.BlockSpec((4, 1, LANE), lambda: (0, 0, 0)),
        ],
        out_specs=pl.BlockSpec((B, LANE), lambda: (0, 0)),
    )(x_pad, w_stack, b_stack)

    # Drop the padded (all-garbage-but-harmless) logit columns.
    return out_pad[:, :OUTPUT_SIZE]


def init_params(key):
    """Torch-like nn.Linear init (U(-1/sqrt(fan_in), +)), then zero-padded and
    stacked into (4,128,128) weights + (4,1,128) biases for the kernel.
    Also returns the unpadded per-layer params for the pure-JAX reference."""
    def linear(key, fan_in, fan_out):
        kw, kb = jax.random.split(key)
        bound = 1.0 / jnp.sqrt(jnp.float32(fan_in))
        w = jax.random.uniform(kw, (fan_in, fan_out), jnp.float32, -bound, bound)
        b = jax.random.uniform(kb, (fan_out,), jnp.float32, -bound, bound)
        return w, b

    k1, k2, k3, k4 = jax.random.split(key, 4)
    layers = [
        linear(k1, INPUT_SIZE, HIDDEN_SIZE),
        linear(k2, HIDDEN_SIZE, HIDDEN_SIZE),
        linear(k3, HIDDEN_SIZE, HIDDEN_SIZE),
        linear(k4, HIDDEN_SIZE, OUTPUT_SIZE),
    ]

    w_stack = jnp.zeros((4, LANE, LANE), jnp.float32)
    b_stack = jnp.zeros((4, 1, LANE), jnp.float32)
    for i, (w, b) in enumerate(layers):
        w_stack = w_stack.at[i, : w.shape[0], : w.shape[1]].set(w)
        b_stack = b_stack.at[i, 0, : b.shape[0]].set(b)

    return (w_stack, b_stack), layers


def policy_ref(x, layers):
    """Pure-JAX reference (unpadded) for correctness checking."""
    (w1, b1), (w2, b2), (w3, b3), (w4, b4) = layers
    h = jnp.maximum(x @ w1 + b1, 0.0)
    h = jnp.maximum(h @ w2 + b2, 0.0)
    h = jnp.maximum(h @ w3 + b3, 0.0)
    logits = h @ w4 + b4
    return jax.nn.softmax(logits, axis=0)  # dim=0, same as the torch code


if __name__ == "__main__":
    key = jax.random.PRNGKey(0)
    kx, kp = jax.random.split(key)

    B = 8  # small batch of 9-dim states (e.g. tic-tac-toe boards)
    x = jax.random.normal(kx, (B, INPUT_SIZE), jnp.float32)
    packed_params, layers = init_params(kp)

    out = policy_forward(x, packed_params)
    out = jax.block_until_ready(out)

    ref = policy_ref(x, layers)
    assert out.shape == (B, OUTPUT_SIZE)
    # approx reciprocal in the softmax epilogue -> slightly looser tolerance
    assert jnp.allclose(out, ref, atol=2e-3, rtol=2e-3), "mismatch vs reference"
    # columns of the output should each sum to ~1 (softmax over dim=0)
    assert jnp.allclose(jnp.sum(out, axis=0), jnp.ones((OUTPUT_SIZE,)), atol=2e-3)

    print("KERNEL_OK")
</pallas_src>

<mosaic_0001>
module attributes {stable_mosaic.version = 11 : i64} {
  func.func @_policy_kernel(%arg0: memref<8x128xf32, #tpu.memory_space<vmem>>, %arg1: memref<4x128x128xf32, #tpu.memory_space<vmem>>, %arg2: memref<4x1x128xf32, #tpu.memory_space<vmem>>, %arg3: memref<8x128xf32, #tpu.memory_space<vmem>>) attributes {dimension_semantics = [], scalar_prefetch = 0 : i64, scratch_operands = 0 : i64, tpu.core_type = #tpu.core_type<tc>} {
    %c0 = arith.constant 0 : index
    %c0_0 = arith.constant 0 : index
    %0 = vector.load %arg0[%c0, %c0_0] : memref<8x128xf32, #tpu.memory_space<vmem>>, vector<8x128xf32>
    %c0_1 = arith.constant 0 : index
    %c0_2 = arith.constant 0 : index
    %c0_3 = arith.constant 0 : index
    %1 = vector.load %arg1[%c0_1, %c0_2, %c0_3] : memref<4x128x128xf32, #tpu.memory_space<vmem>>, vector<1x128x128xf32>
    %2 = vector.shape_cast %1 : vector<1x128x128xf32> to vector<128x128xf32>
    %cst = arith.constant dense<0.000000e+00> : vector<8x128xf32>
    %3 = tpu.matmul %0, %2, %cst {dimension_numbers = #tpu.dot_dimension_numbers<[1], [0], [0], [1], [0, 0, 1, 1], [], []>} : vector<8x128xf32>, vector<128x128xf32>, vector<8x128xf32> -> vector<8x128xf32>
    %c0_4 = arith.constant 0 : index
    %c0_5 = arith.constant 0 : index
    %c0_6 = arith.constant 0 : index
    %4 = vector.load %arg2[%c0_4, %c0_5, %c0_6] : memref<4x1x128xf32, #tpu.memory_space<vmem>>, vector<1x1x128xf32>
    %5 = vector.shape_cast %4 : vector<1x1x128xf32> to vector<1x128xf32>
    %6 = vector.broadcast %5 : vector<1x128xf32> to vector<8x128xf32>
    %7 = arith.addf %3, %6 : vector<8x128xf32>
    %cst_7 = arith.constant 0.000000e+00 : f32
    %8 = vector.broadcast %cst_7 : f32 to vector<8x128xf32>
    %9 = arith.maximumf %7, %8 : vector<8x128xf32>
    %c1 = arith.constant 1 : index
    %c0_8 = arith.constant 0 : index
    %c0_9 = arith.constant 0 : index
    %10 = vector.load %arg1[%c1, %c0_8, %c0_9] : memref<4x128x128xf32, #tpu.memory_space<vmem>>, vector<1x128x128xf32>
    %11 = vector.shape_cast %10 : vector<1x128x128xf32> to vector<128x128xf32>
    %cst_10 = arith.constant dense<0.000000e+00> : vector<8x128xf32>
    %12 = tpu.matmul %9, %11, %cst_10 {dimension_numbers = #tpu.dot_dimension_numbers<[1], [0], [0], [1], [0, 0, 1, 1], [], []>} : vector<8x128xf32>, vector<128x128xf32>, vector<8x128xf32> -> vector<8x128xf32>
    %c1_11 = arith.constant 1 : index
    %c0_12 = arith.constant 0 : index
    %c0_13 = arith.constant 0 : index
    %13 = vector.load %arg2[%c1_11, %c0_12, %c0_13] : memref<4x1x128xf32, #tpu.memory_space<vmem>>, vector<1x1x128xf32>
    %14 = vector.shape_cast %13 : vector<1x1x128xf32> to vector<1x128xf32>
    %15 = vector.broadcast %14 : vector<1x128xf32> to vector<8x128xf32>
    %16 = arith.addf %12, %15 : vector<8x128xf32>
    %cst_14 = arith.constant 0.000000e+00 : f32
    %17 = vector.broadcast %cst_14 : f32 to vector<8x128xf32>
    %18 = arith.maximumf %16, %17 : vector<8x128xf32>
    %c2 = arith.constant 2 : index
    %c0_15 = arith.constant 0 : index
    %c0_16 = arith.constant 0 : index
    %19 = vector.load %arg1[%c2, %c0_15, %c0_16] : memref<4x128x128xf32, #tpu.memory_space<vmem>>, vector<1x128x128xf32>
    %20 = vector.shape_cast %19 : vector<1x128x128xf32> to vector<128x128xf32>
    %cst_17 = arith.constant dense<0.000000e+00> : vector<8x128xf32>
    %21 = tpu.matmul %18, %20, %cst_17 {dimension_numbers = #tpu.dot_dimension_numbers<[1], [0], [0], [1], [0, 0, 1, 1], [], []>} : vector<8x128xf32>, vector<128x128xf32>, vector<8x128xf32> -> vector<8x128xf32>
    %c2_18 = arith.constant 2 : index
    %c0_19 = arith.constant 0 : index
    %c0_20 = arith.constant 0 : index
    %22 = vector.load %arg2[%c2_18, %c0_19, %c0_20] : memref<4x1x128xf32, #tpu.memory_space<vmem>>, vector<1x1x128xf32>
    %23 = vector.shape_cast %22 : vector<1x1x128xf32> to vector<1x128xf32>
    %24 = vector.broadcast %23 : vector<1x128xf32> to vector<8x128xf32>
    %25 = arith.addf %21, %24 : vector<8x128xf32>
    %cst_21 = arith.constant 0.000000e+00 : f32
    %26 = vector.broadcast %cst_21 : f32 to vector<8x128xf32>
    %27 = arith.maximumf %25, %26 : vector<8x128xf32>
    %c3 = arith.constant 3 : index
    %c0_22 = arith.constant 0 : index
    %c0_23 = arith.constant 0 : index
    %28 = vector.load %arg1[%c3, %c0_22, %c0_23] : memref<4x128x128xf32, #tpu.memory_space<vmem>>, vector<1x128x128xf32>
    %29 = vector.shape_cast %28 : vector<1x128x128xf32> to vector<128x128xf32>
    %cst_24 = arith.constant dense<0.000000e+00> : vector<8x128xf32>
    %30 = tpu.matmul %27, %29, %cst_24 {dimension_numbers = #tpu.dot_dimension_numbers<[1], [0], [0], [1], [0, 0, 1, 1], [], []>} : vector<8x128xf32>, vector<128x128xf32>, vector<8x128xf32> -> vector<8x128xf32>
    %c3_25 = arith.constant 3 : index
    %c0_26 = arith.constant 0 : index
    %c0_27 = arith.constant 0 : index
    %31 = vector.load %arg2[%c3_25, %c0_26, %c0_27] : memref<4x1x128xf32, #tpu.memory_space<vmem>>, vector<1x1x128xf32>
    %32 = vector.shape_cast %31 : vector<1x1x128xf32> to vector<1x128xf32>
    %33 = vector.broadcast %32 : vector<1x128xf32> to vector<8x128xf32>
    %34 = arith.addf %30, %33 : vector<8x128xf32>
    %cst_28 = arith.constant dense<0xFF800000> : vector<128xf32>
    %35 = vector.multi_reduction <maximumf>, %34, %cst_28 [0] : vector<8x128xf32> to vector<128xf32>
    %36 = vector.shape_cast %35 : vector<128xf32> to vector<1x128xf32>
    %37 = vector.broadcast %36 : vector<1x128xf32> to vector<8x128xf32>
    %38 = arith.subf %34, %37 : vector<8x128xf32>
    %39 = math.exp %38 : vector<8x128xf32>
    %cst_29 = arith.constant dense<0.000000e+00> : vector<128xf32>
    %40 = vector.multi_reduction <add>, %39, %cst_29 [0] : vector<8x128xf32> to vector<128xf32>
    %41 = vector.shape_cast %40 : vector<128xf32> to vector<1x128xf32>
    %42 = tpu.reciprocal %41 {approx = true} : vector<1x128xf32> -> vector<1x128xf32>
    %43 = vector.broadcast %42 : vector<1x128xf32> to vector<8x128xf32>
    %44 = arith.mulf %39, %43 : vector<8x128xf32>
    %c0_30 = arith.constant 0 : index
    %c0_31 = arith.constant 0 : index
    %45 = vector.load %arg3[%c0_30, %c0_31] : memref<8x128xf32, #tpu.memory_space<vmem>>, vector<8x128xf32>
    tpu.vector_store %arg3[%c0_30, %c0_31], %44 {strides = array<i32>} : memref<8x128xf32, #tpu.memory_space<vmem>>, vector<8x128xf32>,
    return
  }
}

</mosaic_0001>

<llo_original>
// kernel: tpu_custom_call.1
$region0: #{tpu_custom_call.1}
  #allocation0 [shape = 'u32[]', space=smem, size = 0x4, offset = 0x4, fixed_abs, tag = 'smem constant byte address 0x4 - core index']
  #allocation1 [shape = 'u32[144,128]{1,0:T(1,128)}', space=vmem, size = 0x12000, scoped, tag = 'internal scratch']
  %s0 = inlined_call_operand.hbm [shape: f32[8,128], index: 0, kind: input, shape index: {}]
  %s1 = inlined_call_operand.hbm [shape: f32[4,128,128], index: 1, kind: input, shape index: {}]
  %s2 = inlined_call_operand.hbm [shape: f32[4,1,128], index: 2, kind: input, shape index: {}]
  %s3 = inlined_call_operand.hbm [shape: f32[8,128], index: 3, kind: output, shape index: {}]
  %s4 = sld [smem:[#allocation0]]
  $region34: #{tpu_custom_call.1} parent=0
    _
  %s6 = ssub.s32 1, %s4
  %s7 = scalar_select 0, %s6, %s4
  $region1: #{tpu_custom_call.1} parent=0
    #allocation2 [shape = 'u8[4096]{0}', space=vmem, size = 0x1000, scoped, tag = 'input window, operand 0, single buffered']
    #allocation3 [shape = 's32[1]{0}', space=sflag, size = 0x4, scoped, tag = 'scoped memory for tpu_custom_call.1']
    #allocation4 [shape = 's32[1]{0}', space=sflag, size = 0x4, scoped, tag = 'scoped memory for tpu_custom_call.1']
    #allocation5 [shape = 'u8[262144]{0}', space=vmem, size = 0x40000, scoped, tag = 'input window, operand 1, single buffered']
    #allocation6 [shape = 's32[1]{0}', space=sflag, size = 0x4, scoped, tag = 'scoped memory for tpu_custom_call.1']
    #allocation7 [shape = 'u8[2048]{0}', space=vmem, size = 0x800, scoped, tag = 'input window, operand 2, single buffered']
    #allocation8 [shape = 'u8[4096]{0}', space=vmem, size = 0x1000, scoped, tag = 'output window, operand 0, single buffered']
    %8 = vsyncpa [#allocation3], 0
    %9 = vsyncpa [#allocation6], 0
    %10 = vsyncpa [#allocation4], 0
    // Predicated region
    $region2: #{tpu_custom_call.1} parent=1 // pred_check
      _
    $region3: #{tpu_custom_call.1} parent=1 // pred_check_branch
      %12 = sbr.rel (0) target = $region5
    $region4: #{tpu_custom_call.1} parent=1 // pred_region
      %s14 = ssub.s32 128, 128
      %15 = vsyncadd [#allocation3], %s14
      %s17 = sshll.u32 [#allocation2], 4
      %s18 = int_to_ptr.vmem [resolvable:$true] %s17
      %20 = dma.hbm_to_vmem [thread:$0]  %s0, 128, %s18, [#allocation3]
    $region5: #{tpu_custom_call.1} parent=1 // pred_fallthru
      _
    // Predicated region
    $region6: #{tpu_custom_call.1} parent=1 // pred_check
      _
    $region7: #{tpu_custom_call.1} parent=1 // pred_check_branch
      %22 = sbr.rel (0) target = $region9
    $region8: #{tpu_custom_call.1} parent=1 // pred_region
      %s24 = ssub.s32 8192, 8192
      %25 = vsyncadd [#allocation6], %s24
      %s26 = sshll.u32 [#allocation5], 4
      %s27 = int_to_ptr.vmem [resolvable:$true] %s26
      %32 = dma.hbm_to_vmem [thread:$0]  %s1, 8192, %s27, [#allocation6], 128, 128, 8
    $region9: #{tpu_custom_call.1} parent=1 // pred_fallthru
      _
    // Predicated region
    $region10: #{tpu_custom_call.1} parent=1 // pred_check
      _
    $region11: #{tpu_custom_call.1} parent=1 // pred_check_branch
      %34 = sbr.rel (0) target = $region13
    $region12: #{tpu_custom_call.1} parent=1 // pred_region
      %s36 = ssub.s32 64, 64
      %37 = vsyncadd [#allocation6], %s36
      %s38 = sshll.u32 [#allocation7], 4
      %s39 = int_to_ptr.vmem [resolvable:$true] %s38
      %44 = dma.hbm_to_vmem [thread:$0]  %s2, 64, %s39, [#allocation6], 16, 16, 1
    $region13: #{tpu_custom_call.1} parent=1 // pred_fallthru
      _
    // Predicated region
    $region14: #{tpu_custom_call.1} parent=1 // pred_check
      _
    $region15: #{tpu_custom_call.1} parent=1 // pred_check_branch
      %46 = sbr.rel (0) target = $region17
    $region16: #{tpu_custom_call.1} parent=1 // pred_region
      %47 = dma.done [#allocation3], 128
    $region17: #{tpu_custom_call.1} parent=1 // pred_fallthru
      _
    // Predicated region
    $region18: #{tpu_custom_call.1} parent=1 // pred_check
      _
    $region19: #{tpu_custom_call.1} parent=1 // pred_check_branch
      %49 = sbr.rel (0) target = $region21
    $region20: #{tpu_custom_call.1} parent=1 // pred_region
      %50 = dma.done [#allocation6], 8192
    $region21: #{tpu_custom_call.1} parent=1 // pred_fallthru
      _
    // Predicated region
    $region22: #{tpu_custom_call.1} parent=1 // pred_check
      _
    $region23: #{tpu_custom_call.1} parent=1 // pred_check_branch
      %52 = sbr.rel (0) target = $region25
    $region24: #{tpu_custom_call.1} parent=1 // pred_region
      %53 = dma.done [#allocation6], 64
    $region25: #{tpu_custom_call.1} parent=1 // pred_fallthru
      _
    %v54 = vld [vmem:[#allocation2] sm:$0xff]
    %v55 = vld [vmem:[#allocation5] sm:$0xff]
    %v56 = vld [vmem:[#allocation5 + $0x8] sm:$0xff]
    %v57 = vld [vmem:[#allocation5 + $0x10] sm:$0xff]
    %v58 = vld [vmem:[#allocation5 + $0x18] sm:$0xff]
    %v59 = vld [vmem:[#allocation5 + $0x20] sm:$0xff]
    %v60 = vld [vmem:[#allocation5 + $0x28] sm:$0xff]
    %v61 = vld [vmem:[#allocation5 + $0x30] sm:$0xff]
    %v62 = vld [vmem:[#allocation5 + $0x38] sm:$0xff]
    %v63 = vld [vmem:[#allocation5 + $0x40] sm:$0xff]
    %v64 = vld [vmem:[#allocation5 + $0x48] sm:$0xff]
    %v65 = vld [vmem:[#allocation5 + $0x50] sm:$0xff]
    %v66 = vld [vmem:[#allocation5 + $0x58] sm:$0xff]
    %v67 = vld [vmem:[#allocation5 + $0x60] sm:$0xff]
    %v68 = vld [vmem:[#allocation5 + $0x68] sm:$0xff]
    %v69 = vld [vmem:[#allocation5 + $0x70] sm:$0xff]
    %v70 = vld [vmem:[#allocation5 + $0x78] sm:$0xff]
    %v71 = vld [vmem:[#allocation7] sm:$0x1]
    %v73 = vlaneseq
    %v74 = vshrl.u32 %v73, 7
    %v75 = vsub.s32 0, %v74
    %v76 = vrot.slane %v71, %v75
    %78 = vmatprep.subr.mxu0 0.0
    %79 = vmatpush1.msra.mxu0 %v70
    %80 = vmatprep.subr.mxu0 0.0
    %81 = vmatpush1.msra.mxu0 %v69
    %82 = vmatprep.subr.mxu0 0.0
    %83 = vmatpush1.msra.mxu0 %v68
    %84 = vmatprep.subr.mxu0 0.0
    %85 = vmatpush1.msra.mxu0 %v67
    %86 = vmatprep.subr.mxu0 0.0
    %87 = vmatpush1.msra.mxu0 %v66
    %88 = vmatprep.subr.mxu0 0.0
    %89 = vmatpush1.msra.mxu0 %v65
    %90 = vmatprep.subr.mxu0 0.0
    %91 = vmatpush1.msra.mxu0 %v64
    %92 = vmatprep.subr.mxu0 0.0
    %93 = vmatpush1.msra.mxu0 %v63
    %94 = vmatprep.subr.mxu0 0.0
    %95 = vmatpush1.msra.mxu0 %v62
    %96 = vmatprep.subr.mxu0 0.0
    %97 = vmatpush1.msra.mxu0 %v61
    %98 = vmatprep.subr.mxu0 0.0
    %99 = vmatpush1.msra.mxu0 %v60
    %100 = vmatprep.subr.mxu0 0.0
    %101 = vmatpush1.msra.mxu0 %v59
    %102 = vmatprep.subr.mxu0 0.0
    %103 = vmatpush1.msra.mxu0 %v58
    %104 = vmatprep.subr.mxu0 0.0
    %105 = vmatpush1.msra.mxu0 %v57
    %106 = vmatprep.subr.mxu0 0.0
    %107 = vmatpush1.msra.mxu0 %v56
    %108 = vmatprep.subr.mxu0 0.0
    %109 = vmatpush1.msra.mxu0 %v55
    %110 = vmatprep.subr.mxu0 0.0
    %111 = vmatpush2.msra.mxu0 0.0
    %112 = vmatprep.subr.mxu0 0.0
    %113 = vmatpush2.msra.mxu0 0.0
    %114 = vmatprep.subr.mxu0 0.0
    %115 = vmatpush2.msra.mxu0 0.0
    %116 = vmatprep.subr.mxu0 0.0
    %117 = vmatpush2.msra.mxu0 0.0
    %118 = vmatprep.subr.mxu0 0.0
    %119 = vmatpush2.msra.mxu0 0.0
    %120 = vmatprep.subr.mxu0 0.0
    %121 = vmatpush2.msra.mxu0 0.0
    %122 = vmatprep.subr.mxu0 0.0
    %123 = vmatpush2.msra.mxu0 0.0
    %124 = vmatprep.subr.mxu0 0.0
    %125 = vmatpush2.msra.mxu0 0.0
    %126 = vmatprep.subr.mxu0 0.0
    %127 = vmatpush2.msra.mxu0 0.0
    %128 = vmatprep.subr.mxu0 0.0
    %129 = vmatpush2.msra.mxu0 0.0
    %130 = vmatprep.subr.mxu0 0.0
    %131 = vmatpush2.msra.mxu0 0.0
    %132 = vmatprep.subr.mxu0 0.0
    %133 = vmatpush2.msra.mxu0 0.0
    %134 = vmatprep.subr.mxu0 0.0
    %135 = vmatpush2.msra.mxu0 0.0
    %136 = vmatprep.subr.mxu0 0.0
    %137 = vmatpush2.msra.mxu0 0.0
    %138 = vmatprep.subr.mxu0 0.0
    %139 = vmatpush2.msra.mxu0 0.0
    %140 = vmatprep.subr.mxu0 0.0
    %141 = vmatpush2.msra.mxu0 0.0
    %142 = vmatprep.mubr.f32.mxu0 0.0
    %143 = vmatmul.mubr.f32.gmra.mxu0 %v54
    %v144 = vpop.f32.mrf.mxu0
    %v145 = vadd.f32 %v76, %v144
    %v146 = vpop.f32.mrf.mxu0
    %147 = vdwg.mxu0
    %v148 = vmax.f32 %v145, 0.0
    %s149 = scalar_lea.vmem [#allocation5], 128
    %v150 = vld [vmem:[%s149] sm:$0xff]
    %v151 = vld [vmem:[%s149 + $0x8] sm:$0xff]
    %v152 = vld [vmem:[%s149 + $0x10] sm:$0xff]
    %v153 = vld [vmem:[%s149 + $0x18] sm:$0xff]
    %v154 = vld [vmem:[%s149 + $0x20] sm:$0xff]
    %v155 = vld [vmem:[%s149 + $0x28] sm:$0xff]
    %v156 = vld [vmem:[%s149 + $0x30] sm:$0xff]
    %v157 = vld [vmem:[%s149 + $0x38] sm:$0xff]
    %v158 = vld [vmem:[%s149 + $0x40] sm:$0xff]
    %v159 = vld [vmem:[%s149 + $0x48] sm:$0xff]
    %v160 = vld [vmem:[%s149 + $0x50] sm:$0xff]
    %v161 = vld [vmem:[%s149 + $0x58] sm:$0xff]
    %v162 = vld [vmem:[%s149 + $0x60] sm:$0xff]
    %v163 = vld [vmem:[%s149 + $0x68] sm:$0xff]
    %v164 = vld [vmem:[%s149 + $0x70] sm:$0xff]
    %v165 = vld [vmem:[%s149 + $0x78] sm:$0xff]
    %s166 = scalar_lea.vmem [#allocation7], 1
    %v167 = vld [vmem:[%s166] sm:$0x1]
    %v169 = vlaneseq
    %v170 = vshrl.u32 %v169, 7
    %v171 = vsub.s32 0, %v170
    %v172 = vrot.slane %v167, %v171
    %174 = vmatprep.subr.mxu0 0.0
    %175 = vmatpush1.msra.mxu0 %v165
    %176 = vmatprep.subr.mxu0 0.0
    %177 = vmatpush1.msra.mxu0 %v164
    %178 = vmatprep.subr.mxu0 0.0
    %179 = vmatpush1.msra.mxu0 %v163
    %180 = vmatprep.subr.mxu0 0.0
    %181 = vmatpush1.msra.mxu0 %v162
    %182 = vmatprep.subr.mxu0 0.0
    %183 = vmatpush1.msra.mxu0 %v161
    %184 = vmatprep.subr.mxu0 0.0
    %185 = vmatpush1.msra.mxu0 %v160
    %186 = vmatprep.subr.mxu0 0.0
    %187 = vmatpush1.msra.mxu0 %v159
    %188 = vmatprep.subr.mxu0 0.0
    %189 = vmatpush1.msra.mxu0 %v158
    %190 = vmatprep.subr.mxu0 0.0
    %191 = vmatpush1.msra.mxu0 %v157
    %192 = vmatprep.subr.mxu0 0.0
    %193 = vmatpush1.msra.mxu0 %v156
    %194 = vmatprep.subr.mxu0 0.0
    %195 = vmatpush1.msra.mxu0 %v155
    %196 = vmatprep.subr.mxu0 0.0
    %197 = vmatpush1.msra.mxu0 %v154
    %198 = vmatprep.subr.mxu0 0.0
    %199 = vmatpush1.msra.mxu0 %v153
    %200 = vmatprep.subr.mxu0 0.0
    %201 = vmatpush1.msra.mxu0 %v152
    %202 = vmatprep.subr.mxu0 0.0
    %203 = vmatpush1.msra.mxu0 %v151
    %204 = vmatprep.subr.mxu0 0.0
    %205 = vmatpush1.msra.mxu0 %v150
    %206 = vmatprep.subr.mxu0 0.0
    %207 = vmatpush2.msra.mxu0 0.0
    %208 = vmatprep.subr.mxu0 0.0
    %209 = vmatpush2.msra.mxu0 0.0
    %210 = vmatprep.subr.mxu0 0.0
    %211 = vmatpush2.msra.mxu0 0.0
    %212 = vmatprep.subr.mxu0 0.0
    %213 = vmatpush2.msra.mxu0 0.0
    %214 = vmatprep.subr.mxu0 0.0
    %215 = vmatpush2.msra.mxu0 0.0
    %216 = vmatprep.subr.mxu0 0.0
    %217 = vmatpush2.msra.mxu0 0.0
    %218 = vmatprep.subr.mxu0 0.0
    %219 = vmatpush2.msra.mxu0 0.0
    %220 = vmatprep.subr.mxu0 0.0
    %221 = vmatpush2.msra.mxu0 0.0
    %222 = vmatprep.subr.mxu0 0.0
    %223 = vmatpush2.msra.mxu0 0.0
    %224 = vmatprep.subr.mxu0 0.0
    %225 = vmatpush2.msra.mxu0 0.0
    %226 = vmatprep.subr.mxu0 0.0
    %227 = vmatpush2.msra.mxu0 0.0
    %228 = vmatprep.subr.mxu0 0.0
    %229 = vmatpush2.msra.mxu0 0.0
    %230 = vmatprep.subr.mxu0 0.0
    %231 = vmatpush2.msra.mxu0 0.0
    %232 = vmatprep.subr.mxu0 0.0
    %233 = vmatpush2.msra.mxu0 0.0
    %234 = vmatprep.subr.mxu0 0.0
    %235 = vmatpush2.msra.mxu0 0.0
    %236 = vmatprep.subr.mxu0 0.0
    %237 = vmatpush2.msra.mxu0 0.0
    %238 = vmatprep.mubr.f32.mxu0 0.0
    %239 = vmatmul.mubr.f32.gmra.mxu0 %v148
    %v240 = vpop.f32.mrf.mxu0
    %v241 = vadd.f32 %v172, %v240
    %v242 = vpop.f32.mrf.mxu0
    %243 = vdwg.mxu0
    %v244 = vmax.f32 %v241, 0.0
    %s245 = scalar_lea.vmem [#allocation5], 256
    %v246 = vld [vmem:[%s245] sm:$0xff]
    %v247 = vld [vmem:[%s245 + $0x8] sm:$0xff]
    %v248 = vld [vmem:[%s245 + $0x10] sm:$0xff]
    %v249 = vld [vmem:[%s245 + $0x18] sm:$0xff]
    %v250 = vld [vmem:[%s245 + $0x20] sm:$0xff]
    %v251 = vld [vmem:[%s245 + $0x28] sm:$0xff]
    %v252 = vld [vmem:[%s245 + $0x30] sm:$0xff]
    %v253 = vld [vmem:[%s245 + $0x38] sm:$0xff]
    %v254 = vld [vmem:[%s245 + $0x40] sm:$0xff]
    %v255 = vld [vmem:[%s245 + $0x48] sm:$0xff]
    %v256 = vld [vmem:[%s245 + $0x50] sm:$0xff]
    %v257 = vld [vmem:[%s245 + $0x58] sm:$0xff]
    %v258 = vld [vmem:[%s245 + $0x60] sm:$0xff]
    %v259 = vld [vmem:[%s245 + $0x68] sm:$0xff]
    %v260 = vld [vmem:[%s245 + $0x70] sm:$0xff]
    %v261 = vld [vmem:[%s245 + $0x78] sm:$0xff]
    %s262 = scalar_lea.vmem [#allocation7], 2
    %v263 = vld [vmem:[%s262] sm:$0x1]
    %v265 = vlaneseq
    %v266 = vshrl.u32 %v265, 7
    %v267 = vsub.s32 0, %v266
    %v268 = vrot.slane %v263, %v267
    %270 = vmatprep.subr.mxu0 0.0
    %271 = vmatpush1.msra.mxu0 %v261
    %272 = vmatprep.subr.mxu0 0.0
    %273 = vmatpush1.msra.mxu0 %v260
    %274 = vmatprep.subr.mxu0 0.0
    %275 = vmatpush1.msra.mxu0 %v259
    %276 = vmatprep.subr.mxu0 0.0
    %277 = vmatpush1.msra.mxu0 %v258
    %278 = vmatprep.subr.mxu0 0.0
    %279 = vmatpush1.msra.mxu0 %v257
    %280 = vmatprep.subr.mxu0 0.0
    %281 = vmatpush1.msra.mxu0 %v256
    %282 = vmatprep.subr.mxu0 0.0
    %283 = vmatpush1.msra.mxu0 %v255
    %284 = vmatprep.subr.mxu0 0.0
    %285 = vmatpush1.msra.mxu0 %v254
    %286 = vmatprep.subr.mxu0 0.0
    %287 = vmatpush1.msra.mxu0 %v253
    %288 = vmatprep.subr.mxu0 0.0
    %289 = vmatpush1.msra.mxu0 %v252
    %290 = vmatprep.subr.mxu0 0.0
    %291 = vmatpush1.msra.mxu0 %v251
    %292 = vmatprep.subr.mxu0 0.0
    %293 = vmatpush1.msra.mxu0 %v250
    %294 = vmatprep.subr.mxu0 0.0
    %295 = vmatpush1.msra.mxu0 %v249
    %296 = vmatprep.subr.mxu0 0.0
    %297 = vmatpush1.msra.mxu0 %v248
    %298 = vmatprep.subr.mxu0 0.0
    %299 = vmatpush1.msra.mxu0 %v247
    %300 = vmatprep.subr.mxu0 0.0
    %301 = vmatpush1.msra.mxu0 %v246
    %302 = vmatprep.subr.mxu0 0.0
    %303 = vmatpush2.msra.mxu0 0.0
    %304 = vmatprep.subr.mxu0 0.0
    %305 = vmatpush2.msra.mxu0 0.0
    %306 = vmatprep.subr.mxu0 0.0
    %307 = vmatpush2.msra.mxu0 0.0
    %308 = vmatprep.subr.mxu0 0.0
    %309 = vmatpush2.msra.mxu0 0.0
    %310 = vmatprep.subr.mxu0 0.0
    %311 = vmatpush2.msra.mxu0 0.0
    %312 = vmatprep.subr.mxu0 0.0
    %313 = vmatpush2.msra.mxu0 0.0
    %314 = vmatprep.subr.mxu0 0.0
    %315 = vmatpush2.msra.mxu0 0.0
    %316 = vmatprep.subr.mxu0 0.0
    %317 = vmatpush2.msra.mxu0 0.0
    %318 = vmatprep.subr.mxu0 0.0
    %319 = vmatpush2.msra.mxu0 0.0
    %320 = vmatprep.subr.mxu0 0.0
    %321 = vmatpush2.msra.mxu0 0.0
    %322 = vmatprep.subr.mxu0 0.0
    %323 = vmatpush2.msra.mxu0 0.0
    %324 = vmatprep.subr.mxu0 0.0
    %325 = vmatpush2.msra.mxu0 0.0
    %326 = vmatprep.subr.mxu0 0.0
    %327 = vmatpush2.msra.mxu0 0.0
    %328 = vmatprep.subr.mxu0 0.0
    %329 = vmatpush2.msra.mxu0 0.0
    %330 = vmatprep.subr.mxu0 0.0
    %331 = vmatpush2.msra.mxu0 0.0
    %332 = vmatprep.subr.mxu0 0.0
    %333 = vmatpush2.msra.mxu0 0.0
    %334 = vmatprep.mubr.f32.mxu0 0.0
    %335 = vmatmul.mubr.f32.gmra.mxu0 %v244
    %v336 = vpop.f32.mrf.mxu0
    %v337 = vadd.f32 %v268, %v336
    %v338 = vpop.f32.mrf.mxu0
    %339 = vdwg.mxu0
    %v340 = vmax.f32 %v337, 0.0
    %s341 = scalar_lea.vmem [#allocation5], 384
    %v342 = vld [vmem:[%s341] sm:$0xff]
    %v343 = vld [vmem:[%s341 + $0x8] sm:$0xff]
    %v344 = vld [vmem:[%s341 + $0x10] sm:$0xff]
    %v345 = vld [vmem:[%s341 + $0x18] sm:$0xff]
    %v346 = vld [vmem:[%s341 + $0x20] sm:$0xff]
    %v347 = vld [vmem:[%s341 + $0x28] sm:$0xff]
    %v348 = vld [vmem:[%s341 + $0x30] sm:$0xff]
    %v349 = vld [vmem:[%s341 + $0x38] sm:$0xff]
    %v350 = vld [vmem:[%s341 + $0x40] sm:$0xff]
    %v351 = vld [vmem:[%s341 + $0x48] sm:$0xff]
    %v352 = vld [vmem:[%s341 + $0x50] sm:$0xff]
    %v353 = vld [vmem:[%s341 + $0x58] sm:$0xff]
    %v354 = vld [vmem:[%s341 + $0x60] sm:$0xff]
    %v355 = vld [vmem:[%s341 + $0x68] sm:$0xff]
    %v356 = vld [vmem:[%s341 + $0x70] sm:$0xff]
    %v357 = vld [vmem:[%s341 + $0x78] sm:$0xff]
    %s358 = scalar_lea.vmem [#allocation7], 3
    %v359 = vld [vmem:[%s358] sm:$0x1]
    %v361 = vlaneseq
    %v362 = vshrl.u32 %v361, 7
    %v363 = vsub.s32 0, %v362
    %v364 = vrot.slane %v359, %v363
    %366 = vmatprep.subr.mxu0 0.0
    %367 = vmatpush1.msra.mxu0 %v357
    %368 = vmatprep.subr.mxu0 0.0
    %369 = vmatpush1.msra.mxu0 %v356
    %370 = vmatprep.subr.mxu0 0.0
    %371 = vmatpush1.msra.mxu0 %v355
    %372 = vmatprep.subr.mxu0 0.0
    %373 = vmatpush1.msra.mxu0 %v354
    %374 = vmatprep.subr.mxu0 0.0
    %375 = vmatpush1.msra.mxu0 %v353
    %376 = vmatprep.subr.mxu0 0.0
    %377 = vmatpush1.msra.mxu0 %v352
    %378 = vmatprep.subr.mxu0 0.0
    %379 = vmatpush1.msra.mxu0 %v351
    %380 = vmatprep.subr.mxu0 0.0
    %381 = vmatpush1.msra.mxu0 %v350
    %382 = vmatprep.subr.mxu0 0.0
    %383 = vmatpush1.msra.mxu0 %v349
    %384 = vmatprep.subr.mxu0 0.0
    %385 = vmatpush1.msra.mxu0 %v348
    %386 = vmatprep.subr.mxu0 0.0
    %387 = vmatpush1.msra.mxu0 %v347
    %388 = vmatprep.subr.mxu0 0.0
    %389 = vmatpush1.msra.mxu0 %v346
    %390 = vmatprep.subr.mxu0 0.0
    %391 = vmatpush1.msra.mxu0 %v345
    %392 = vmatprep.subr.mxu0 0.0
    %393 = vmatpush1.msra.mxu0 %v344
    %394 = vmatprep.subr.mxu0 0.0
    %395 = vmatpush1.msra.mxu0 %v343
    %396 = vmatprep.subr.mxu0 0.0
    %397 = vmatpush1.msra.mxu0 %v342
    %398 = vmatprep.subr.mxu0 0.0
    %399 = vmatpush2.msra.mxu0 0.0
    %400 = vmatprep.subr.mxu0 0.0
    %401 = vmatpush2.msra.mxu0 0.0
    %402 = vmatprep.subr.mxu0 0.0
    %403 = vmatpush2.msra.mxu0 0.0
    %404 = vmatprep.subr.mxu0 0.0
    %405 = vmatpush2.msra.mxu0 0.0
    %406 = vmatprep.subr.mxu0 0.0
    %407 = vmatpush2.msra.mxu0 0.0
    %408 = vmatprep.subr.mxu0 0.0
    %409 = vmatpush2.msra.mxu0 0.0
    %410 = vmatprep.subr.mxu0 0.0
    %411 = vmatpush2.msra.mxu0 0.0
    %412 = vmatprep.subr.mxu0 0.0
    %413 = vmatpush2.msra.mxu0 0.0
    %414 = vmatprep.subr.mxu0 0.0
    %415 = vmatpush2.msra.mxu0 0.0
    %416 = vmatprep.subr.mxu0 0.0
    %417 = vmatpush2.msra.mxu0 0.0
    %418 = vmatprep.subr.mxu0 0.0
    %419 = vmatpush2.msra.mxu0 0.0
    %420 = vmatprep.subr.mxu0 0.0
    %421 = vmatpush2.msra.mxu0 0.0
    %422 = vmatprep.subr.mxu0 0.0
    %423 = vmatpush2.msra.mxu0 0.0
    %424 = vmatprep.subr.mxu0 0.0
    %425 = vmatpush2.msra.mxu0 0.0
    %426 = vmatprep.subr.mxu0 0.0
    %427 = vmatpush2.msra.mxu0 0.0
    %428 = vmatprep.subr.mxu0 0.0
    %429 = vmatpush2.msra.mxu0 0.0
    %430 = vmatprep.mubr.f32.mxu0 0.0
    %431 = vmatmul.mubr.f32.gmra.mxu0 %v340
    %v432 = vpop.f32.mrf.mxu0
    %v433 = vadd.f32 %v364, %v432
    %v434 = vpop.f32.mrf.mxu0
    %435 = vdwg.mxu0
    %v436 = vrot.slane %v433, 4
    %v437 = vmax.f32 %v433, %v436
    %v438 = vrot.slane %v437, 2
    %v439 = vmax.f32 %v437, %v438
    %v440 = vrot.slane %v439, 1
    %v441 = vmax.f32 %v439, %v440
    %v442 = vsub.f32 %v433, %v441
    %v443 = vmul.f32 %v442, 1.442695
    %v444 = vpow.pop %v443
    %v445 = vrot.slane %v444, 4
    %v446 = vadd.f32 %v444, %v445
    %v447 = vrot.slane %v446, 2
    %v448 = vadd.f32 %v446, %v447
    %v449 = vrot.slane %v448, 1
    %v450 = vadd.f32 %v448, %v449
    %v451 = vrcp.pop %v450
    %v452 = vmul.f32 %v444, %v451
    %453 = vst [vmem:[#allocation8] sm:$0xff] %v452
    // Predicated region
    $region26: #{tpu_custom_call.1} parent=1 // pred_check
      _
    $region27: #{tpu_custom_call.1} parent=1 // pred_check_branch
      %455 = sbr.rel (0) target = $region29
    $region28: #{tpu_custom_call.1} parent=1 // pred_region
      %s457 = ssub.s32 128, 128
      %458 = vsyncadd [#allocation4], %s457
      %s460 = sshll.u32 [#allocation8], 4
      %s461 = int_to_ptr.vmem [resolvable:$true] %s460
      %463 = dma.vmem_to_hbm [thread:$0]  %s461, 128, %s3, [#allocation4]
    $region29: #{tpu_custom_call.1} parent=1 // pred_fallthru
      _
    // Predicated region
    $region30: #{tpu_custom_call.1} parent=1 // pred_check
      _
    $region31: #{tpu_custom_call.1} parent=1 // pred_check_branch
      %465 = sbr.rel (0) target = $region33
    $region32: #{tpu_custom_call.1} parent=1 // pred_region
      %466 = dma.done [#allocation4], 128
    $region33: #{tpu_custom_call.1} parent=1 // pred_fallthru
      _
    %467 = vsyncpa [#allocation3], 1
    %468 = vsyncpa [#allocation6], 1
    %469 = vsyncpa [#allocation4], 1

</llo_original>
